<compile_context>
chip_gen: v5e
topology: v5e:2x2
jax: 0.10.0
libtpu: 0.0.40
codegen_flags: <defaults>
</compile_context>

<pallas_src>
import jax
import jax.numpy as jnp
from jax.experimental import pallas as pl
from jax.experimental.pallas import tpu as pltpu

NEG_SLOPE = 0.01  # F.leaky_relu default


def _round_up(x, m):
    return ((x + m - 1) // m) * m


def cnnet_kernel(x_ref, wt_ref, b_ref, o_ref):
    # x_ref:  (TB, 64)  flattened input boards (f32 or bf16 batch tile)
    # wt_ref: (64, 64)  conv weight flattened & transposed -> (K, O), VMEM-resident
    # b_ref:  (1, 64)   conv bias (f32), VMEM-resident
    # o_ref:  (1, TB)   lane-dense output block
    x = x_ref[...]
    xf = x.astype(jnp.float32)

    # conv1 with full-size 8x8 kernel == dense layer (MXU matmul, f32 accumulate)
    z = jnp.dot(x, wt_ref[...], preferred_element_type=jnp.float32) + b_ref[...]

    # leaky_relu (VPU)
    w = jnp.where(z > 0, z, NEG_SLOPE * z)

    # elementwise product with the raw input, reduce over feature dim, tanh,
    # then store as a lane-dense (1, TB) row.
    r = jnp.sum(xf * w, axis=1)            # (TB,)
    o_ref[...] = jnp.tanh(r)[None, :]      # (1, TB)


def cnnet_forward(s, conv_w, conv_b, *, tb=1024, act_dtype=jnp.bfloat16):
    """s: anything reshapeable to (-1, 1, 8, 8); conv_w: (64,1,8,8); conv_b: (64,).

    act_dtype: dtype fed to the MXU for x / W (bf16 halves HBM traffic; all math
    after the matmul is f32). Returns a (B,) f32 array.
    """
    x = jnp.reshape(s, (-1, 64))
    B = x.shape[0]

    # Tile the batch; tb is kept a multiple of 128 so every block shape obeys
    # the (8, 128) tiling rule. VMEM per tile: tb*64*4B (f32) double-buffered,
    # trivially within v7x's 32 MiB scoped limit for tb <= a few thousand.
    tb = min(tb, _round_up(B, 128))
    assert tb % 128 == 0, "tb must be a multiple of 128"
    padded = _round_up(B, tb)
    num_tiles = padded // tb
    if padded != B:
        x = jnp.pad(x, ((0, padded - B), (0, 0)))
    if x.dtype != act_dtype:
        x = x.astype(act_dtype)

    wt = jnp.reshape(conv_w, (64, 64)).T.astype(act_dtype)   # (K=64, O=64)
    b2 = jnp.reshape(conv_b, (1, 64)).astype(jnp.float32)    # (1, 64)

    out = pl.pallas_call(
        cnnet_kernel,
        out_shape=jax.ShapeDtypeStruct((1, padded), jnp.float32),
        grid=(num_tiles,),
        in_specs=[
            pl.BlockSpec((tb, 64), lambda i: (i, 0)),     # batch tile (pipelined)
            pl.BlockSpec((64, 64), lambda i: (0, 0)),     # weight: resident
            pl.BlockSpec((1, 64), lambda i: (0, 0)),      # bias: resident
        ],
        out_specs=pl.BlockSpec((1, tb), lambda i: (0, i)),  # lane-dense output
        compiler_params=pltpu.CompilerParams(
            dimension_semantics=("parallel",),
        ),
    )(x, wt, b2)
    return out[0, :B]   # (B,)


def _reference(s, conv_w, conv_b):
    """Plain-JAX f32 reference mirroring the PyTorch forward."""
    x = jnp.reshape(s, (-1, 64)).astype(jnp.float32)
    wt = jnp.reshape(conv_w, (64, 64)).T
    z = x @ wt + jnp.reshape(conv_b, (1, 64))
    w = jnp.where(z > 0, z, NEG_SLOPE * z)
    return jnp.tanh(jnp.sum(x * w, axis=1))


if __name__ == "__main__":
    key = jax.random.PRNGKey(0)
    k_in, k_w, k_b = jax.random.split(key, 3)

    batch = 300  # deliberately not a multiple of the tile -> exercises tail padding
    # Deterministic synthetic parameters (shapes from nn.Conv2d(1, 64, (8, 8)))
    fan_in = 1 * 8 * 8
    bound = 1.0 / (fan_in ** 0.5)
    conv_w = jax.random.uniform(k_w, (64, 1, 8, 8), jnp.float32, -bound, bound)
    conv_b = jax.random.uniform(k_b, (64,), jnp.float32, -bound, bound)
    s = jax.random.normal(k_in, (batch, 1, 8, 8), jnp.float32)

    ref = _reference(s, conv_w, conv_b)

    # Exact-semantics check: f32 operands end to end.
    out_f32 = jax.block_until_ready(
        cnnet_forward(s, conv_w, conv_b, tb=128, act_dtype=jnp.float32))
    assert out_f32.shape == (batch,)
    assert jnp.allclose(out_f32, ref, atol=1e-5, rtol=1e-5), "f32 mismatch vs reference"

    # Performance path: bf16 MXU operands (halved HBM traffic), f32 accumulate/epilogue.
    out_bf16 = jax.block_until_ready(
        cnnet_forward(s, conv_w, conv_b, tb=128, act_dtype=jnp.bfloat16))
    assert out_bf16.shape == (batch,)
    assert jnp.allclose(out_bf16, ref, atol=5e-2), "bf16 mismatch vs f32 reference"

    print("KERNEL_OK")
</pallas_src>

<mosaic_0001>
module attributes {stable_mosaic.version = 11 : i64} {
  func.func @cnnet_kernel(%arg0: i32, %arg1: memref<128x64xf32, #tpu.memory_space<vmem>>, %arg2: memref<64x64xf32, #tpu.memory_space<vmem>>, %arg3: memref<1x64xf32, #tpu.memory_space<vmem>>, %arg4: memref<1x128xf32, #tpu.memory_space<vmem>>) attributes {dimension_semantics = [#tpu.dimension_semantics<parallel>], iteration_bounds = array<i64: 3>, scalar_prefetch = 0 : i64, scratch_operands = 0 : i64, tpu.core_type = #tpu.core_type<tc>, window_params = [{transform_indices = @transform_0, window_bounds = array<i64: 128, 64>}, {pipeline_mode = #tpu.pipeline_mode<synchronous>, transform_indices = @transform_1, window_bounds = array<i64: 64, 64>}, {pipeline_mode = #tpu.pipeline_mode<synchronous>, transform_indices = @transform_2, window_bounds = array<i64: 1, 64>}, {transform_indices = @transform_3, window_bounds = array<i64: 1, 128>}]} {
    %c0 = arith.constant 0 : index
    %c0_0 = arith.constant 0 : index
    %0 = vector.load %arg1[%c0, %c0_0] : memref<128x64xf32, #tpu.memory_space<vmem>>, vector<128x64xf32>
    %c0_1 = arith.constant 0 : index
    %c0_2 = arith.constant 0 : index
    %1 = vector.load %arg2[%c0_1, %c0_2] : memref<64x64xf32, #tpu.memory_space<vmem>>, vector<64x64xf32>
    %cst = arith.constant dense<0.000000e+00> : vector<128x64xf32>
    %2 = tpu.matmul %0, %1, %cst {dimension_numbers = #tpu.dot_dimension_numbers<[1], [0], [0], [1], [0, 0, 1, 1], [], []>} : vector<128x64xf32>, vector<64x64xf32>, vector<128x64xf32> -> vector<128x64xf32>
    %c0_3 = arith.constant 0 : index
    %c0_4 = arith.constant 0 : index
    %3 = vector.load %arg3[%c0_3, %c0_4] : memref<1x64xf32, #tpu.memory_space<vmem>>, vector<1x64xf32>
    %4 = vector.broadcast %3 : vector<1x64xf32> to vector<128x64xf32>
    %5 = arith.addf %2, %4 : vector<128x64xf32>
    %cst_5 = arith.constant 0.000000e+00 : f32
    %6 = vector.broadcast %cst_5 : f32 to vector<128x64xf32>
    %7 = arith.cmpf ogt, %5, %6 : vector<128x64xf32>
    %cst_6 = arith.constant 0.00999999977 : f32
    %8 = vector.broadcast %cst_6 : f32 to vector<128x64xf32>
    %9 = arith.mulf %8, %5 : vector<128x64xf32>
    %10 = arith.select %7, %5, %9 : vector<128x64xi1>, vector<128x64xf32>
    %11 = arith.mulf %0, %10 : vector<128x64xf32>
    %cst_7 = arith.constant dense<0.000000e+00> : vector<128xf32>
    %12 = vector.multi_reduction <add>, %11, %cst_7 [1] : vector<128x64xf32> to vector<128xf32>
    %13 = math.tanh %12 : vector<128xf32>
    %14 = vector.shape_cast %13 : vector<128xf32> to vector<1x128xf32>
    %c0_8 = arith.constant 0 : index
    %c0_9 = arith.constant 0 : index
    %15 = vector.load %arg4[%c0_8, %c0_9] : memref<1x128xf32, #tpu.memory_space<vmem>>, vector<1x128xf32>
    tpu.vector_store %arg4[%c0_8, %c0_9], %14 {strides = array<i32>} : memref<1x128xf32, #tpu.memory_space<vmem>>, vector<1x128xf32>,
    return
  }
  func.func @transform_0(%arg0: i32) -> (i32, i32) {
    %c0_i32 = arith.constant 0 : i32
    %c0_i32_0 = arith.constant 0 : i32
    return %arg0, %c0_i32 : i32, i32
  }
  func.func @transform_1(%arg0: i32) -> (i32, i32) {
    %c0_i32 = arith.constant 0 : i32
    %c0_i32_0 = arith.constant 0 : i32
    %c0_i32_1 = arith.constant 0 : i32
    return %c0_i32, %c0_i32_0 : i32, i32
  }
  func.func @transform_2(%arg0: i32) -> (i32, i32) {
    %c0_i32 = arith.constant 0 : i32
    %c0_i32_0 = arith.constant 0 : i32
    %c0_i32_1 = arith.constant 0 : i32
    return %c0_i32, %c0_i32_0 : i32, i32
  }
  func.func @transform_3(%arg0: i32) -> (i32, i32) {
    %c0_i32 = arith.constant 0 : i32
    %c0_i32_0 = arith.constant 0 : i32
    return %c0_i32, %arg0 : i32, i32
  }
}

</mosaic_0001>

<llo_original>
// kernel: tpu_custom_call.1
$region0: #{tpu_custom_call.1}
  #allocation0 [shape = 'u32[]', space=smem, size = 0x4, offset = 0x4, fixed_abs, tag = 'smem constant byte address 0x4 - core index']
  #allocation1 [shape = 'u32[72,128]{1,0:T(1,128)}', space=vmem, size = 0x9000, scoped, tag = 'internal scratch']
  %s0 = inlined_call_operand.vmem [shape: f32[384,64], index: 0, kind: input, shape index: {}]
  %s1 = inlined_call_operand.vmem [shape: f32[64,64], index: 1, kind: input, shape index: {}]
  %s2 = inlined_call_operand.vmem [shape: f32[1,64], index: 2, kind: input, shape index: {}]
  %s3 = inlined_call_operand.hbm [shape: f32[1,384], index: 3, kind: output, shape index: {}]
  %s4 = sld [smem:[#allocation0]]
  $region45: #{tpu_custom_call.1} parent=0
    _
  %s6 = ssub.s32 1, %s4
  %s7 = scalar_select 0, %s6, %s4
  $region1: #{tpu_custom_call.1} parent=0
    #allocation2 [shape = 'u8[1024]{0}', space=vmem, size = 0x400, scoped, tag = 'output window, operand 0']
    #allocation3 [shape = 's32[2]{0}', space=sflag, size = 0x8, scoped, tag = 'scoped memory for tpu_custom_call.1']
    %8 = vsyncpa [#allocation3], 0
    %s9 = scalar_lea.sflag [#allocation3], 1
    %10 = vsyncpa %s9, 0
    loop: start=0, step=1, limit=5
    $region2: #{tpu_custom_call.1} parent=1 // loop_pre_header
      _
    $region3: #{tpu_custom_call.1} parent=1 // loop_header
      %s12 = sphi 0, %s16
      %p13 = scmp.ge.s32.totalorder %s12, 5
      %s22 = sphi 0, %s24
      %s25 = sphi 0, %s22
      %s26 = sphi 0, %s25
      %s42 = sphi 0, %s26
      %s46 = sphi 0, %s46
      %s48 = sphi 0, %s46
      %s49 = sphi 0, %s48
      %s63 = sphi 0, %s49
      %s67 = sphi 0, %s67
      %s69 = sphi 0, %s67
      %s70 = sphi 0, %s69
      %s84 = sphi 0, %s70
      %s90 = sphi 0, %s92
      %s93 = sphi 0, %s90
      %s94 = sphi 0, %s93
      %s110 = sphi 0, %s94
    $region4: #{tpu_custom_call.1} parent=1 // loop_header_branch
      %15 = sbr.rel (%p13) target = $region8
    $region5: #{tpu_custom_call.1} parent=1 // loop_body
      %s17 = ssub.s32 %s12, 1
      %s18 = ssub.s32 %s12, 2
      %s19 = sadd.s32 %s12, 1
      %s20 = ssub.s32 %s12, %s19
      %p21 = scmp.eq.s32.totalorder %s20, 0
      %s23 = sadd.s32 %s22, 1
      %s24 = scalar_select %p21, %s22, %s23
      %p27 = pneg %p21
      %p28 = scmp.eq.s32.totalorder %s12, 2
      %p29 = por %p27, %p28
      %p30 = scmp.ne.s32.totalorder %s22, %s25
      %p31 = scmp.eq.s32.totalorder %s12, 0
      %p32 = por %p30, %p31
      %p33 = scmp.ne.s32.totalorder %s22, %s25
      %p34 = scmp.eq.s32.totalorder %s17, 2
      %p35 = por %p33, %p34
      %p36 = scmp.ne.s32.totalorder %s25, %s26
      %p37 = scmp.eq.s32.totalorder %s17, 0
      %p38 = por %p36, %p37
      %p39 = scmp.ne.s32.totalorder %s25, %s26
      %p40 = scmp.eq.s32.totalorder %s18, 2
      %p41 = por %p39, %p40
      %p43 = scmp.ne.s32.totalorder %s26, %s42
      %p44 = scmp.eq.s32.totalorder %s18, 0
      %p45 = por %p43, %p44
      %s47 = sadd.s32 %s46, 1
      %p50 = scmp.eq.s32.totalorder %s12, 2
      %p51 = scmp.ne.s32.totalorder %s46, %s48
      %p52 = scmp.eq.s32.totalorder %s12, 0
      %p53 = por %p51, %p52
      %p54 = scmp.ne.s32.totalorder %s46, %s48
      %p55 = scmp.eq.s32.totalorder %s17, 2
      %p56 = por %p54, %p55
      %p57 = scmp.ne.s32.totalorder %s48, %s49
      %p58 = scmp.eq.s32.totalorder %s17, 0
      %p59 = por %p57, %p58
      %p60 = scmp.ne.s32.totalorder %s48, %s49
      %p61 = scmp.eq.s32.totalorder %s18, 2
      %p62 = por %p60, %p61
      %p64 = scmp.ne.s32.totalorder %s49, %s63
      %p65 = scmp.eq.s32.totalorder %s18, 0
      %p66 = por %p64, %p65
      %s68 = sadd.s32 %s67, 1
      %p71 = scmp.eq.s32.totalorder %s12, 2
      %p72 = scmp.ne.s32.totalorder %s67, %s69
      %p73 = scmp.eq.s32.totalorder %s12, 0
      %p74 = por %p72, %p73
      %p75 = scmp.ne.s32.totalorder %s67, %s69
      %p76 = scmp.eq.s32.totalorder %s17, 2
      %p77 = por %p75, %p76
      %p78 = scmp.ne.s32.totalorder %s69, %s70
      %p79 = scmp.eq.s32.totalorder %s17, 0
      %p80 = por %p78, %p79
      %p81 = scmp.ne.s32.totalorder %s69, %s70
      %p82 = scmp.eq.s32.totalorder %s18, 2
      %p83 = por %p81, %p82
      %p85 = scmp.ne.s32.totalorder %s70, %s84
      %p86 = scmp.eq.s32.totalorder %s18, 0
      %p87 = por %p85, %p86
      %s88 = ssub.s32 %s12, %s19
      %p89 = scmp.eq.s32.totalorder %s88, 0
      %s91 = sadd.s32 %s90, 1
      %s92 = scalar_select %p89, %s90, %s91
      %p95 = pneg %p89
      %p96 = scmp.eq.s32.totalorder %s12, 2
      %p97 = por %p95, %p96
      %p98 = scmp.ne.s32.totalorder %s90, %s93
      %p99 = scmp.eq.s32.totalorder %s12, 0
      %p100 = por %p98, %p99
      %p101 = scmp.ne.s32.totalorder %s90, %s93
      %p102 = scmp.eq.s32.totalorder %s17, 2
      %p103 = por %p101, %p102
      %p104 = scmp.ne.s32.totalorder %s93, %s94
      %p105 = scmp.eq.s32.totalorder %s17, 0
      %p106 = por %p104, %p105
      %p107 = scmp.ne.s32.totalorder %s93, %s94
      %p108 = scmp.eq.s32.totalorder %s18, 2
      %p109 = por %p107, %p108
      %p111 = scmp.ne.s32.totalorder %s94, %s110
      %p112 = scmp.eq.s32.totalorder %s18, 0
      %p113 = por %p111, %p112
      %p114 = scmp.le.s32.totalorder 1, %s12
      %p115 = scmp.lt.s32.totalorder %s12, 4
      %p116 = pnand %p114, %p115
      %p117 = pneg %p116
      // Predicated region
      $region9: #{tpu_custom_call.1} parent=5 // pred_check
        _
      $region10: #{tpu_custom_call.1} parent=5 // pred_check_branch
        %119 = sbr.rel (%p116) target = $region12
      $region11: #{tpu_custom_call.1} parent=5 // pred_region
        %s120 = ssub.s32 %s12, 1
        // Predicated region
        $region13: #{tpu_custom_call.1} parent=11 // pred_check
          %p121 = pneg %p59
        $region14: #{tpu_custom_call.1} parent=11 // pred_check_branch
          %123 = sbr.rel (%p121) target = $region16
        $region15: #{tpu_custom_call.1} parent=11 // pred_region
          _
        $region16: #{tpu_custom_call.1} parent=11 // pred_fallthru
          _
        // Predicated region
        $region17: #{tpu_custom_call.1} parent=11 // pred_check
          %p124 = pneg %p80
        $region18: #{tpu_custom_call.1} parent=11 // pred_check_branch
          %126 = sbr.rel (%p124) target = $region20
        $region19: #{tpu_custom_call.1} parent=11 // pred_region
          _
        $region20: #{tpu_custom_call.1} parent=11 // pred_fallthru
          _
      $region12: #{tpu_custom_call.1} parent=5 // pred_fallthru
        _
      %p127 = scmp.lt.s32.totalorder %s12, 3
      // Predicated region
      $region21: #{tpu_custom_call.1} parent=5 // pred_check
        %p128 = pneg %p127
      $region22: #{tpu_custom_call.1} parent=5 // pred_check_branch
        %130 = sbr.rel (%p128) target = $region24
      $region23: #{tpu_custom_call.1} parent=5 // pred_region
        // Predicated region
        $region25: #{tpu_custom_call.1} parent=23 // pred_check
          %p131 = pneg %p32
        $region26: #{tpu_custom_call.1} parent=23 // pred_check_branch
          %133 = sbr.rel (%p131) target = $region28
        $region27: #{tpu_custom_call.1} parent=23 // pred_region
          %s134 = smul.u32 16, %s12
          %p135 = scmp.lt.s32.totalorder %s134, 47
          %s136 = scalar_select %p135, %s134, 47
          %s137 = smul.addr %s136, 8
          %s138 = scalar_lea.vmem %s0, %s137
          %s139 = smul.u32 16, %s12
        $region28: #{tpu_custom_call.1} parent=23 // pred_fallthru
          _
      $region24: #{tpu_custom_call.1} parent=5 // pred_fallthru
        _
      %p140 = scmp.le.s32.totalorder 1, %s12
      %p141 = scmp.lt.s32.totalorder %s12, 4
      %p142 = pnand %p140, %p141
      %p143 = pneg %p142
      // Predicated region
      $region29: #{tpu_custom_call.1} parent=5 // pred_check
        _
      $region30: #{tpu_custom_call.1} parent=5 // pred_check_branch
        %145 = sbr.rel (%p142) target = $region32
      $region31: #{tpu_custom_call.1} parent=5 // pred_region
        %s146 = ssub.s32 %s12, 1
        %s147 = smul.u32 16, %s17
        %p148 = scmp.lt.s32.totalorder %s147, 47
        %s149 = scalar_select %p148, %s147, 47
        %s150 = smul.addr %s149, 8
        %s151 = scalar_lea.vmem %s0, %s150
        %p152 = pneg %p38
        %p153 = pneg %p35
        %p154 = pneg %p59
        %p155 = pneg %p56
        %p156 = pneg %p80
        %p157 = pneg %p77
        %p158 = pneg %p106
        %p159 = pneg %p103
        %s160 = sand.u32 %s93, 1
        %s161 = scalar_lea.sflag [#allocation3], %s160
        %s162 = sand.u32 %s93, 1
        %s163 = scalar_lea.vmem [#allocation2], %s162
        %s164 = smul.u32 16, %s17
        %p165 = scmp.lt.s32.totalorder %s164, 47
        %s166 = scalar_select %p165, %s164, 47
        %s167 = smul.addr %s166, 8
        %s168 = scalar_lea.vmem %s0, %s167
        %s169 = smul.u32 16, %s17
        %v170 = vld [vmem:[%s168] sm:$0xff]
        %v171 = vld [vmem:[%s168 + $0x8] sm:$0xff]
        %v172 = vld [vmem:[%s168 + $0x10] sm:$0xff]
        %v173 = vld [vmem:[%s168 + $0x18] sm:$0xff]
        %v174 = vld [vmem:[%s168 + $0x20] sm:$0xff]
        %v175 = vld [vmem:[%s168 + $0x28] sm:$0xff]
        %v176 = vld [vmem:[%s168 + $0x30] sm:$0xff]
        %v177 = vld [vmem:[%s168 + $0x38] sm:$0xff]
        %v178 = vld [vmem:[%s168 + $0x40] sm:$0xff]
        %v179 = vld [vmem:[%s168 + $0x48] sm:$0xff]
        %v180 = vld [vmem:[%s168 + $0x50] sm:$0xff]
        %v181 = vld [vmem:[%s168 + $0x58] sm:$0xff]
        %v182 = vld [vmem:[%s168 + $0x60] sm:$0xff]
        %v183 = vld [vmem:[%s168 + $0x68] sm:$0xff]
        %v184 = vld [vmem:[%s168 + $0x70] sm:$0xff]
        %v185 = vld [vmem:[%s168 + $0x78] sm:$0xff]
        %v186 = vld [vmem:[%s1] sm:$0xff]
        %v187 = vld [vmem:[%s1 + $0x8] sm:$0xff]
        %v188 = vld [vmem:[%s1 + $0x10] sm:$0xff]
        %v189 = vld [vmem:[%s1 + $0x18] sm:$0xff]
        %v190 = vld [vmem:[%s1 + $0x20] sm:$0xff]
        %v191 = vld [vmem:[%s1 + $0x28] sm:$0xff]
        %v192 = vld [vmem:[%s1 + $0x30] sm:$0xff]
        %v193 = vld [vmem:[%s1 + $0x38] sm:$0xff]
        %v194 = vld [vmem:[%s2] sm:$0x1]
        %v196 = vperm.slane %v194, 0
        %vm198 = vcmask 523264
        %v200 = vsel %vm198, %v170, 0
        %v203 = vsel %vm198, %v171, 0
        %v206 = vsel %vm198, %v172, 0
        %v209 = vsel %vm198, %v173, 0
        %v212 = vsel %vm198, %v174, 0
        %v215 = vsel %vm198, %v175, 0
        %v218 = vsel %vm198, %v176, 0
        %v221 = vsel %vm198, %v177, 0
        %v224 = vsel %vm198, %v178, 0
        %v227 = vsel %vm198, %v179, 0
        %v230 = vsel %vm198, %v180, 0
        %v233 = vsel %vm198, %v181, 0
        %v236 = vsel %vm198, %v182, 0
        %v239 = vsel %vm198, %v183, 0
        %v242 = vsel %vm198, %v184, 0
        %v245 = vsel %vm198, %v185, 0
        %247 = vmatpush.msra.mxu0 0.0
        %248 = vmatpush.msra.mxu0 0.0
        %249 = vmatpush.msra.mxu0 0.0
        %250 = vmatpush.msra.mxu0 0.0
        %251 = vmatpush.msra.mxu0 0.0
        %252 = vmatpush.msra.mxu0 0.0
        %253 = vmatpush.msra.mxu0 0.0
        %254 = vmatpush.msra.mxu0 0.0
        %255 = vmatpush.msra.mxu0 %v193
        %256 = vmatpush.msra.mxu0 %v192
        %257 = vmatpush.msra.mxu0 %v191
        %258 = vmatpush.msra.mxu0 %v190
        %259 = vmatpush.msra.mxu0 %v189
        %260 = vmatpush.msra.mxu0 %v188
        %261 = vmatpush.msra.mxu0 %v187
        %262 = vmatpush.msra.mxu0 %v186
        %263 = vmatmul.f32.gmra.mxu0 %v200
        %v264 = vpop.f32.mrf.mxu0
        %v265 = vadd.f32 %v196, %v264
        %266 = vmatmul.f32.gmra.mxu0 %v203
        %v267 = vpop.f32.mrf.mxu0
        %v268 = vadd.f32 %v196, %v267
        %269 = vmatmul.f32.gmra.mxu0 %v206
        %v270 = vpop.f32.mrf.mxu0
        %v271 = vadd.f32 %v196, %v270
        %272 = vmatmul.f32.gmra.mxu0 %v209
        %v273 = vpop.f32.mrf.mxu0
        %v274 = vadd.f32 %v196, %v273
        %275 = vmatmul.f32.gmra.mxu0 %v212
        %v276 = vpop.f32.mrf.mxu0
        %v277 = vadd.f32 %v196, %v276
        %278 = vmatmul.f32.gmra.mxu0 %v215
        %v279 = vpop.f32.mrf.mxu0
        %v280 = vadd.f32 %v196, %v279
        %281 = vmatmul.f32.gmra.mxu0 %v218
        %v282 = vpop.f32.mrf.mxu0
        %v283 = vadd.f32 %v196, %v282
        %284 = vmatmul.f32.gmra.mxu0 %v221
        %v285 = vpop.f32.mrf.mxu0
        %v286 = vadd.f32 %v196, %v285
        %287 = vmatmul.f32.gmra.mxu0 %v224
        %v288 = vpop.f32.mrf.mxu0
        %v289 = vadd.f32 %v196, %v288
        %290 = vmatmul.f32.gmra.mxu0 %v227
        %v291 = vpop.f32.mrf.mxu0
        %v292 = vadd.f32 %v196, %v291
        %293 = vmatmul.f32.gmra.mxu0 %v230
        %v294 = vpop.f32.mrf.mxu0
        %v295 = vadd.f32 %v196, %v294
        %296 = vmatmul.f32.gmra.mxu0 %v233
        %v297 = vpop.f32.mrf.mxu0
        %v298 = vadd.f32 %v196, %v297
        %299 = vmatmul.f32.gmra.mxu0 %v236
        %v300 = vpop.f32.mrf.mxu0
        %v301 = vadd.f32 %v196, %v300
        %302 = vmatmul.f32.gmra.mxu0 %v239
        %v303 = vpop.f32.mrf.mxu0
        %v304 = vadd.f32 %v196, %v303
        %305 = vmatmul.f32.gmra.mxu0 %v242
        %v306 = vpop.f32.mrf.mxu0
        %v307 = vadd.f32 %v196, %v306
        %308 = vmatmul.f32.gmra.mxu0 %v245
        %v309 = vpop.f32.mrf.mxu0
        %v310 = vadd.f32 %v196, %v309
        %311 = vdwg.mxu0
        %vm312 = vcmp.gt.f32.partialorder %v265, 0.0
        %vm313 = vcmp.gt.f32.partialorder %v268, 0.0
        %vm314 = vcmp.gt.f32.partialorder %v271, 0.0
        %vm315 = vcmp.gt.f32.partialorder %v274, 0.0
        %vm316 = vcmp.gt.f32.partialorder %v277, 0.0
        %vm317 = vcmp.gt.f32.partialorder %v280, 0.0
        %vm318 = vcmp.gt.f32.partialorder %v283, 0.0
        %vm319 = vcmp.gt.f32.partialorder %v286, 0.0
        %vm320 = vcmp.gt.f32.partialorder %v289, 0.0
        %vm321 = vcmp.gt.f32.partialorder %v292, 0.0
        %vm322 = vcmp.gt.f32.partialorder %v295, 0.0
        %vm323 = vcmp.gt.f32.partialorder %v298, 0.0
        %vm324 = vcmp.gt.f32.partialorder %v301, 0.0
        %vm325 = vcmp.gt.f32.partialorder %v304, 0.0
        %vm326 = vcmp.gt.f32.partialorder %v307, 0.0
        %vm327 = vcmp.gt.f32.partialorder %v310, 0.0
        %v328 = vmul.f32 %v265, 0.01
        %v329 = vmul.f32 %v268, 0.01
        %v330 = vmul.f32 %v271, 0.01
        %v331 = vmul.f32 %v274, 0.01
        %v332 = vmul.f32 %v277, 0.01
        %v333 = vmul.f32 %v280, 0.01
        %v334 = vmul.f32 %v283, 0.01
        %v335 = vmul.f32 %v286, 0.01
        %v336 = vmul.f32 %v289, 0.01
        %v337 = vmul.f32 %v292, 0.01
        %v338 = vmul.f32 %v295, 0.01
        %v339 = vmul.f32 %v298, 0.01
        %v340 = vmul.f32 %v301, 0.01
        %v341 = vmul.f32 %v304, 0.01
        %v342 = vmul.f32 %v307, 0.01
        %v343 = vmul.f32 %v310, 0.01
        %v344 = vsel %vm312, %v265, %v328
        %v345 = vsel %vm313, %v268, %v329
        %v346 = vsel %vm314, %v271, %v330
        %v347 = vsel %vm315, %v274, %v331
        %v348 = vsel %vm316, %v277, %v332
        %v349 = vsel %vm317, %v280, %v333
        %v350 = vsel %vm318, %v283, %v334
        %v351 = vsel %vm319, %v286, %v335
        %v352 = vsel %vm320, %v289, %v336
        %v353 = vsel %vm321, %v292, %v337
        %v354 = vsel %vm322, %v295, %v338
        %v355 = vsel %vm323, %v298, %v339
        %v356 = vsel %vm324, %v301, %v340
        %v357 = vsel %vm325, %v304, %v341
        %v358 = vsel %vm326, %v307, %v342
        %v359 = vsel %vm327, %v310, %v343
        %v360 = vmul.f32 %v170, %v344
        %v361 = vmul.f32 %v171, %v345
        %v362 = vmul.f32 %v172, %v346
        %v363 = vmul.f32 %v173, %v347
        %v364 = vmul.f32 %v174, %v348
        %v365 = vmul.f32 %v175, %v349
        %v366 = vmul.f32 %v176, %v350
        %v367 = vmul.f32 %v177, %v351
        %v368 = vmul.f32 %v178, %v352
        %v369 = vmul.f32 %v179, %v353
        %v370 = vmul.f32 %v180, %v354
        %v371 = vmul.f32 %v181, %v355
        %v372 = vmul.f32 %v182, %v356
        %v373 = vmul.f32 %v183, %v357
        %v374 = vmul.f32 %v184, %v358
        %v375 = vmul.f32 %v185, %v359
        %v376 = vsel %vm198, %v360, 0.0
        %377 = vadd.xlane.f32.xlu0 %v376
        %v378 = vpop.xlane.xlu0 %377
        %v379 = vsel %vm198, %v361, 0.0
        %380 = vadd.xlane.f32.xlu0 %v379
        %v381 = vpop.xlane.xlu0 %380
        %v382 = vsel %vm198, %v362, 0.0
        %383 = vadd.xlane.f32.xlu0 %v382
        %v384 = vpop.xlane.xlu0 %383
        %v385 = vsel %vm198, %v363, 0.0
        %386 = vadd.xlane.f32.xlu0 %v385
        %v387 = vpop.xlane.xlu0 %386
        %v388 = vsel %vm198, %v364, 0.0
        %389 = vadd.xlane.f32.xlu0 %v388
        %v390 = vpop.xlane.xlu0 %389
        %v391 = vsel %vm198, %v365, 0.0
        %392 = vadd.xlane.f32.xlu0 %v391
        %v393 = vpop.xlane.xlu0 %392
        %v394 = vsel %vm198, %v366, 0.0
        %395 = vadd.xlane.f32.xlu0 %v394
        %v396 = vpop.xlane.xlu0 %395
        %v397 = vsel %vm198, %v367, 0.0
        %398 = vadd.xlane.f32.xlu0 %v397
        %v399 = vpop.xlane.xlu0 %398
        %v400 = vsel %vm198, %v368, 0.0
        %401 = vadd.xlane.f32.xlu0 %v400
        %v402 = vpop.xlane.xlu0 %401
        %v403 = vsel %vm198, %v369, 0.0
        %404 = vadd.xlane.f32.xlu0 %v403
        %v405 = vpop.xlane.xlu0 %404
        %v406 = vsel %vm198, %v370, 0.0
        %407 = vadd.xlane.f32.xlu0 %v406
        %v408 = vpop.xlane.xlu0 %407
        %v409 = vsel %vm198, %v371, 0.0
        %410 = vadd.xlane.f32.xlu0 %v409
        %v411 = vpop.xlane.xlu0 %410
        %v412 = vsel %vm198, %v372, 0.0
        %413 = vadd.xlane.f32.xlu0 %v412
        %v414 = vpop.xlane.xlu0 %413
        %v415 = vsel %vm198, %v373, 0.0
        %416 = vadd.xlane.f32.xlu0 %v415
        %v417 = vpop.xlane.xlu0 %416
        %v418 = vsel %vm198, %v374, 0.0
        %419 = vadd.xlane.f32.xlu0 %v418
        %v420 = vpop.xlane.xlu0 %419
        %v421 = vsel %vm198, %v375, 0.0
        %422 = vadd.xlane.f32.xlu0 %v421
        %v423 = vpop.xlane.xlu0 %422
        %v424 = vtanh.pop %v378
        %v425 = vtanh.pop %v381
        %v426 = vtanh.pop %v384
        %v427 = vtanh.pop %v387
        %v428 = vtanh.pop %v390
        %v429 = vtanh.pop %v393
        %v430 = vtanh.pop %v396
        %v431 = vtanh.pop %v399
        %v432 = vtanh.pop %v402
        %v433 = vtanh.pop %v405
        %v434 = vtanh.pop %v408
        %v435 = vtanh.pop %v411
        %v436 = vtanh.pop %v414
        %v437 = vtanh.pop %v417
        %v438 = vtanh.pop %v420
        %v439 = vtanh.pop %v423
        %v456 = vlaneseq
        %v457 = vand.u32 %v456, 127
        %v458 = vperm.slane %v424, %v457
        %v459 = vadd.s32 %v457, 4294967288
        %v460 = vperm.slane %v425, %v459
        %vm461 = vcmask 130112
        %v462 = vsel %vm461, %v460, %v458
        %v463 = vadd.s32 %v457, 4294967280
        %v464 = vperm.slane %v426, %v463
        %vm465 = vcmask 195712
        %v466 = vsel %vm465, %v464, %v462
        %v467 = vadd.s32 %v457, 4294967272
        %v468 = vperm.slane %v427, %v467
        %vm469 = vcmask 261312
        %v470 = vsel %vm469, %v468, %v466
        %v471 = vadd.s32 %v457, 4294967264
        %v472 = vperm.slane %v428, %v471
        %vm473 = vcmask 326912
        %v474 = vsel %vm473, %v472, %v470
        %v475 = vadd.s32 %v457, 4294967256
        %v476 = vperm.slane %v429, %v475
        %vm477 = vcmask 392512
        %v478 = vsel %vm477, %v476, %v474
        %v479 = vadd.s32 %v457, 4294967248
        %v480 = vperm.slane %v430, %v479
        %vm481 = vcmask 458112
        %v482 = vsel %vm481, %v480, %v478
        %v483 = vadd.s32 %v457, 4294967240
        %v484 = vperm.slane %v431, %v483
        %vm485 = vcmask 523712
        %v486 = vsel %vm485, %v484, %v482
        %v487 = vadd.s32 %v457, 4294967232
        %v488 = vperm.slane %v432, %v487
        %vm489 = vcmask 589312
        %v490 = vsel %vm489, %v488, %v486
        %v491 = vadd.s32 %v457, 4294967224
        %v492 = vperm.slane %v433, %v491
        %vm493 = vcmask 654912
        %v494 = vsel %vm493, %v492, %v490
        %v495 = vadd.s32 %v457, 4294967216
        %v496 = vperm.slane %v434, %v495
        %vm497 = vcmask 720512
        %v498 = vsel %vm497, %v496, %v494
        %v499 = vadd.s32 %v457, 4294967208
        %v500 = vperm.slane %v435, %v499
        %vm501 = vcmask 786112
        %v502 = vsel %vm501, %v500, %v498
        %v503 = vadd.s32 %v457, 4294967200
        %v504 = vperm.slane %v436, %v503
        %vm505 = vcmask 851712
        %v506 = vsel %vm505, %v504, %v502
        %v507 = vadd.s32 %v457, 4294967192
        %v508 = vperm.slane %v437, %v507
        %vm509 = vcmask 917312
        %v510 = vsel %vm509, %v508, %v506
        %v511 = vadd.s32 %v457, 4294967184
        %v512 = vperm.slane %v438, %v511
        %vm513 = vcmask 982912
        %v514 = vsel %vm513, %v512, %v510
        %v515 = vadd.s32 %v457, 4294967176
        %v516 = vperm.slane %v439, %v515
        %vm517 = vcmask 1048512
        %v518 = vsel %vm517, %v516, %v514
        %520 = vst [vmem:[%s163] sm:$0x1] %v518
        %s521 = sand.u32 %s93, 1
        %s522 = scalar_lea.sflag [#allocation3], %s521
        %s523 = sand.u32 %s93, 1
        %s524 = scalar_lea.vmem [#allocation2], %s523
        // Predicated region
        $region33: #{tpu_custom_call.1} parent=31 // pred_check
          %p525 = pneg %p103
        $region34: #{tpu_custom_call.1} parent=31 // pred_check_branch
          %527 = sbr.rel (%p525) target = $region36
        $region35: #{tpu_custom_call.1} parent=31 // pred_region
          %529 = vsyncadd %s522, 0
          %s530 = scalar_lea.hbm %s3, %s17
          %s532 = sshll.u32 %s524, 4
          %s533 = int_to_ptr.vmem [resolvable:$true] %s532
          %s534 = sshll.u32 %s530, 4
          %s535 = int_to_ptr.hbm [resolvable:$true] %s534
          %537 = dma.vmem_to_hbm [thread:$0]  %s533, 16, %s535, %s522
        $region36: #{tpu_custom_call.1} parent=31 // pred_fallthru
          _
      $region32: #{tpu_custom_call.1} parent=5 // pred_fallthru
        _
      %p538 = scmp.le.s32.totalorder 2, %s12
      // Predicated region
      $region37: #{tpu_custom_call.1} parent=5 // pred_check
        %p539 = pneg %p538
      $region38: #{tpu_custom_call.1} parent=5 // pred_check_branch
        %541 = sbr.rel (%p539) target = $region40
      $region39: #{tpu_custom_call.1} parent=5 // pred_region
        %s542 = ssub.s32 %s12, 2
        // Predicated region
        $region41: #{tpu_custom_call.1} parent=39 // pred_check
          %p543 = pneg %p109
        $region42: #{tpu_custom_call.1} parent=39 // pred_check_branch
          %545 = sbr.rel (%p543) target = $region44
        $region43: #{tpu_custom_call.1} parent=39 // pred_region
          %s546 = sand.u32 %s94, 1
          %s547 = scalar_lea.sflag [#allocation3], %s546
          %s548 = sand.u32 %s94, 1
          %s549 = scalar_lea.vmem [#allocation2], %s548
          %551 = dma.done %s547, 16
        $region44: #{tpu_custom_call.1} parent=39 // pred_fallthru
          _
      $region40: #{tpu_custom_call.1} parent=5 // pred_fallthru
        _
    $region6: #{tpu_custom_call.1} parent=1 // loop_footer
      %s16 = sadd.s32 1, %s12
    $region7: #{tpu_custom_call.1} parent=1 // loop_footer_branch
      %11 = sbr.rel target = $region3
    $region8: #{tpu_custom_call.1} parent=1 // loop_exit
      _
    %552 = vsyncpa [#allocation3], 1
    %s553 = scalar_lea.sflag [#allocation3], 1
    %554 = vsyncpa %s553, 1

</llo_original>
